<compile_context>
chip_gen: v7x
topology: tpu7x:2x2x1
jax: 0.10.0
libtpu: 0.0.40
codegen_flags: <defaults>
</compile_context>

<pallas_src>
import functools

import jax
import jax.numpy as jnp
from jax import lax
from jax.experimental import pallas as pl
from jax.experimental.pallas import tpu as pltpu

GAMMA = 2.0  # fixed (see TODO above); pow written as (1-p)*(1-p)

_LANE = 128
_OUT_SUBLANES = 8  # each core's partial sum lives in one (8, 128) f32 tile


def _generation_plan():
    """Generation-aware (block_budget_bytes, vmem_limit_bytes, core_splits)."""
    try:
        vmem_bytes = int(pltpu.get_tpu_info().vmem_capacity_bytes)
    except Exception:  # detection failed (e.g. interpret mode) -> safe defaults
        vmem_bytes = 64 * 1024 * 1024

    # Per-step input-block budget and scoped VMEM limit derived from capacity:
    #   v5e/v6e (128 MiB): 8 MiB blocks, 64 MiB limit.
    #   v7x-class (64 MiB per TC): 4 MiB blocks, 32 MiB limit.
    block_budget = max(1 * 2**20, min(8 * 2**20, vmem_bytes // 16))
    vmem_limit = max(16 * 2**20, min(64 * 2**20, vmem_bytes // 2))
    # Split the batch over both TensorCores only on the 2-TC generation
    # (64 MiB-per-core class); single "arbitrary" stream on v5e/v6e.
    core_splits = 1 if vmem_bytes >= 96 * 2**20 else 2
    return block_budget, vmem_limit, core_splits


def _sublane_align(dtype):
    itemsize = jnp.dtype(dtype).itemsize
    if itemsize >= 4:
        return 8
    if itemsize == 2:
        return 16
    return 32


def _pick_tile_n(n, c, dtype, block_budget_bytes):
    """Largest aligned row tile whose (logits + padded target) block fits."""
    align = _sublane_align(dtype)
    itemsize = jnp.dtype(dtype).itemsize
    per_row_logits = ((c + _LANE - 1) // _LANE) * _LANE * itemsize
    per_row_target = _LANE * 4  # (tile_n, 1) int32 block pads lanes to 128
    per_row = per_row_logits + per_row_target
    t = block_budget_bytes // per_row
    t = max(align, (t // align) * align)
    n_padded = ((n + align - 1) // align) * align
    return min(t, n_padded)


def _focal_ce_partial_kernel(logits_ref, target_ref, out_ref, *,
                             n_total, tile_n, tiles_per_core):
    # logits_ref: (TILE_N, C)   input dtype (f32 / bf16), upcast in-kernel
    # target_ref: (TILE_N, 1)   int32
    # out_ref:    (8, 128)      f32 per-core partial-sum slab, resident over j
    c_id = pl.program_id(0)
    j = pl.program_id(1)

    @pl.when(j == 0)
    def _():
        out_ref[...] = jnp.zeros_like(out_ref)

    x = logits_ref[...].astype(jnp.float32)          # (TILE_N, C)
    t = target_ref[...]                              # (TILE_N, 1) int32
    tn, cdim = x.shape

    # Numerically stable log-softmax pieces (exp -> EUP, reduces -> XLU).
    m = jnp.max(x, axis=-1, keepdims=True)           # (TILE_N, 1)
    z = x - m                                        # (TILE_N, C)
    lse = jnp.log(jnp.sum(jnp.exp(z), axis=-1, keepdims=True))  # (TILE_N, 1)

    # One-hot gather of the target logit via lane-iota compare.
    # TODO(synk): targets outside [0, C) silently contribute tgt_logit=0
    # (PyTorch CrossEntropyLoss would error / ignore_index them).
    col = lax.broadcasted_iota(jnp.int32, (tn, cdim), 1)
    tgt_logit = jnp.sum(jnp.where(col == t, z, 0.0), axis=-1, keepdims=True)

    # Mask rows past the true batch size using the UNCLAMPED global tile
    # index: the ragged final tile and any clamped grid-padding tiles
    # contribute exactly zero, and the true select also stops inf/NaN from
    # unspecified padded-row contents propagating into the sum.
    g = c_id * tiles_per_core + j
    row = lax.broadcasted_iota(jnp.int32, (tn, 1), 0) + g * tile_n
    nll = jnp.where(row < n_total, lse - tgt_logit, 0.0)   # per-sample CE

    out_ref[...] += jnp.sum(nll)                      # broadcast into slab


def calc_loss_with_label_smooth(logits, target, gt_val=0.9, tile_n=None):
    """logits: (N, C) float array; target: (N,) int array -> scalar f32 loss."""
    del gt_val  # unused in the reference forward
    n, c = logits.shape

    block_budget, vmem_limit, core_splits = _generation_plan()
    align = _sublane_align(logits.dtype)

    if tile_n is None:
        tile_n = _pick_tile_n(n, c, logits.dtype, block_budget)
    tile_n = max(align, (int(tile_n) // align) * align)  # sublane-pack aligned

    num_tiles = -(-n // tile_n)
    tiles_per_core = -(-num_tiles // core_splits)

    target2d = target.astype(jnp.int32).reshape(n, 1)

    def _block_index(ci, ji):
        # Clamp grid-padding tiles onto the last valid block (no OOB DMA);
        # their rows are masked out inside the kernel.
        return jnp.minimum(ci * tiles_per_core + ji, num_tiles - 1)

    kernel = functools.partial(
        _focal_ce_partial_kernel,
        n_total=n, tile_n=tile_n, tiles_per_core=tiles_per_core,
    )

    partial_slabs = pl.pallas_call(
        kernel,
        out_shape=jax.ShapeDtypeStruct(
            (core_splits * _OUT_SUBLANES, _LANE), jnp.float32),
        grid_spec=pltpu.PrefetchScalarGridSpec(
            num_scalar_prefetch=0,
            grid=(core_splits, tiles_per_core),
            in_specs=[
                pl.BlockSpec((tile_n, c), lambda ci, ji: (_block_index(ci, ji), 0)),
                pl.BlockSpec((tile_n, 1), lambda ci, ji: (_block_index(ci, ji), 0)),
            ],
            out_specs=pl.BlockSpec((_OUT_SUBLANES, _LANE),
                                   lambda ci, ji: (ci, 0)),
        ),
        compiler_params=pltpu.CompilerParams(
            dimension_semantics=("parallel", "arbitrary"),
            vmem_limit_bytes=vmem_limit,
        ),
    )(logits, target2d)

    # Finalize over the tiny per-core partials on the JAX side.
    total_nll = jnp.sum(partial_slabs[0::_OUT_SUBLANES, 0])
    logp = total_nll / jnp.float32(n)                 # mean CE
    p = jnp.exp(-logp)
    one_minus_p = 1.0 - p
    return one_minus_p * one_minus_p * logp           # (1 - p) ** 2 * logp


def _reference(logits, target):
    # Pure-JAX reference for sanity.
    x = logits.astype(jnp.float32)
    logprobs = jax.nn.log_softmax(x, axis=-1)
    nll = -jnp.take_along_axis(
        logprobs, target[:, None].astype(jnp.int32), axis=-1
    )[:, 0]
    logp = jnp.mean(nll)
    p = jnp.exp(-logp)
    return (1.0 - p) * (1.0 - p) * logp


if __name__ == "__main__":
    key = jax.random.PRNGKey(0)

    # Case 1: multi-tile grid, N NOT a multiple of the tile (masking + ragged
    # final tile + possible grid-padding tiles when core_splits == 2).
    k1, k2, k3, k4 = jax.random.split(key, 4)
    N1, C1 = 200, 128
    logits1 = jax.random.normal(k1, (N1, C1), dtype=jnp.float32)
    target1 = jax.random.randint(k2, (N1,), 0, C1, dtype=jnp.int32)
    loss1 = jax.block_until_ready(
        calc_loss_with_label_smooth(logits1, target1, tile_n=32)
    )
    ref1 = _reference(logits1, target1)
    assert jnp.allclose(loss1, ref1, atol=1e-5, rtol=1e-5), (loss1, ref1)

    # Case 2: small problem, auto tile size (single tile per core).
    N2, C2 = 64, 16
    logits2 = jax.random.normal(k3, (N2, C2), dtype=jnp.float32)
    target2 = jax.random.randint(k4, (N2,), 0, C2, dtype=jnp.int32)
    loss2 = jax.block_until_ready(calc_loss_with_label_smooth(logits2, target2))
    ref2 = _reference(logits2, target2)
    assert jnp.allclose(loss2, ref2, atol=1e-5, rtol=1e-5), (loss2, ref2)

    print("KERNEL_OK")
</pallas_src>

<mosaic_0001>
module attributes {stable_mosaic.version = 11 : i64} {
  func.func @_focal_ce_partial_kernel(%arg0: i32, %arg1: i32, %arg2: memref<32x128xf32, #tpu.memory_space<vmem>>, %arg3: memref<32x1xi32, #tpu.memory_space<vmem>>, %arg4: memref<8x128xf32, #tpu.memory_space<vmem>>) attributes {dimension_semantics = [#tpu.dimension_semantics<parallel>, #tpu.dimension_semantics<arbitrary>], iteration_bounds = array<i64: 2, 4>, scalar_prefetch = 0 : i64, scratch_operands = 0 : i64, tpu.core_type = #tpu.core_type<tc>, window_params = [{transform_indices = @transform_0, window_bounds = array<i64: 32, 128>}, {transform_indices = @transform_1, window_bounds = array<i64: 32, 1>}, {transform_indices = @transform_2, window_bounds = array<i64: 8, 128>}]} {
    %c0_i32 = arith.constant 0 : i32
    %0 = arith.cmpi eq, %arg1, %c0_i32 : i32
    %1 = arith.extui %0 : i1 to i32
    %c0_i32_0 = arith.constant 0 : i32
    %2 = arith.cmpi ne, %1, %c0_i32_0 : i32
    scf.if %2 {
      %cst_13 = arith.constant 0.000000e+00 : f32
      %39 = vector.broadcast %cst_13 : f32 to vector<8x128xf32>
      %c0_14 = arith.constant 0 : index
      %c0_15 = arith.constant 0 : index
      %40 = vector.load %arg4[%c0_14, %c0_15] : memref<8x128xf32, #tpu.memory_space<vmem>>, vector<8x128xf32>
      tpu.vector_store %arg4[%c0_14, %c0_15], %39 {strides = array<i32>} : memref<8x128xf32, #tpu.memory_space<vmem>>, vector<8x128xf32>,
    } else {
    }
    %c0 = arith.constant 0 : index
    %c0_1 = arith.constant 0 : index
    %3 = vector.load %arg2[%c0, %c0_1] : memref<32x128xf32, #tpu.memory_space<vmem>>, vector<32x128xf32>
    %c0_2 = arith.constant 0 : index
    %c0_3 = arith.constant 0 : index
    %4 = vector.load %arg3[%c0_2, %c0_3] : memref<32x1xi32, #tpu.memory_space<vmem>>, vector<32x1xi32>
    %cst = arith.constant dense<0xFF800000> : vector<32xf32>
    %5 = vector.multi_reduction <maximumf>, %3, %cst [1] : vector<32x128xf32> to vector<32xf32>
    %6 = vector.shape_cast %5 : vector<32xf32> to vector<32x1xf32>
    %7 = vector.broadcast %6 : vector<32x1xf32> to vector<32x128xf32>
    %8 = arith.subf %3, %7 : vector<32x128xf32>
    %9 = math.exp %8 : vector<32x128xf32>
    %cst_4 = arith.constant dense<0.000000e+00> : vector<32xf32>
    %10 = vector.multi_reduction <add>, %9, %cst_4 [1] : vector<32x128xf32> to vector<32xf32>
    %11 = vector.shape_cast %10 : vector<32xf32> to vector<32x1xf32>
    %12 = math.log %11 : vector<32x1xf32>
    %13 = tpu.iota {dimensions = array<i32: 1>} : vector<32x128xi32>
    %14 = vector.broadcast %4 : vector<32x1xi32> to vector<32x128xi32>
    %15 = arith.cmpi eq, %13, %14 : vector<32x128xi32>
    %cst_5 = arith.constant 0.000000e+00 : f32
    %16 = vector.broadcast %cst_5 : f32 to vector<32x128xf32>
    %17 = arith.select %15, %8, %16 : vector<32x128xi1>, vector<32x128xf32>
    %cst_6 = arith.constant dense<0.000000e+00> : vector<32xf32>
    %18 = vector.multi_reduction <add>, %17, %cst_6 [1] : vector<32x128xf32> to vector<32xf32>
    %19 = vector.shape_cast %18 : vector<32xf32> to vector<32x1xf32>
    %c4_i32 = arith.constant 4 : i32
    %20 = arith.muli %arg0, %c4_i32 : i32
    %21 = arith.addi %20, %arg1 : i32
    %22 = tpu.iota {dimensions = array<i32: 0>} : vector<32x1xi32>
    %c32_i32 = arith.constant 32 : i32
    %23 = arith.muli %21, %c32_i32 : i32
    %24 = vector.broadcast %23 : i32 to vector<32x1xi32>
    %25 = arith.addi %22, %24 : vector<32x1xi32>
    %c200_i32 = arith.constant 200 : i32
    %26 = vector.broadcast %c200_i32 : i32 to vector<32x1xi32>
    %27 = arith.cmpi slt, %25, %26 : vector<32x1xi32>
    %28 = arith.subf %12, %19 : vector<32x1xf32>
    %cst_7 = arith.constant 0.000000e+00 : f32
    %29 = vector.broadcast %cst_7 : f32 to vector<32x1xf32>
    %30 = arith.select %27, %28, %29 : vector<32x1xi1>, vector<32x1xf32>
    %c0_8 = arith.constant 0 : index
    %c0_9 = arith.constant 0 : index
    %31 = vector.load %arg4[%c0_8, %c0_9] : memref<8x128xf32, #tpu.memory_space<vmem>>, vector<8x128xf32>
    %32 = vector.shape_cast %30 : vector<32x1xf32> to vector<1x32x1xf32>
    %cst_10 = arith.constant dense<0.000000e+00> : vector<1xf32>
    %33 = vector.multi_reduction <add>, %32, %cst_10 [1, 2] : vector<1x32x1xf32> to vector<1xf32>
    %34 = vector.shape_cast %33 : vector<1xf32> to vector<1x1x1xf32>
    %35 = vector.extract %34[0, 0, 0] : f32 from vector<1x1x1xf32>
    %36 = vector.broadcast %35 : f32 to vector<8x128xf32>
    %37 = arith.addf %31, %36 : vector<8x128xf32>
    %c0_11 = arith.constant 0 : index
    %c0_12 = arith.constant 0 : index
    %38 = vector.load %arg4[%c0_11, %c0_12] : memref<8x128xf32, #tpu.memory_space<vmem>>, vector<8x128xf32>
    tpu.vector_store %arg4[%c0_11, %c0_12], %37 {strides = array<i32>} : memref<8x128xf32, #tpu.memory_space<vmem>>, vector<8x128xf32>,
    return
  }
  func.func @transform_0(%arg0: i32, %arg1: i32) -> (i32, i32) {
    %c4_i32 = arith.constant 4 : i32
    %0 = arith.muli %arg0, %c4_i32 : i32
    %1 = arith.addi %0, %arg1 : i32
    %c6_i32 = arith.constant 6 : i32
    %2 = arith.minsi %1, %c6_i32 : i32
    %c0_i32 = arith.constant 0 : i32
    %c0_i32_0 = arith.constant 0 : i32
    return %2, %c0_i32 : i32, i32
  }
  func.func @transform_1(%arg0: i32, %arg1: i32) -> (i32, i32) {
    %c4_i32 = arith.constant 4 : i32
    %0 = arith.muli %arg0, %c4_i32 : i32
    %1 = arith.addi %0, %arg1 : i32
    %c6_i32 = arith.constant 6 : i32
    %2 = arith.minsi %1, %c6_i32 : i32
    %c0_i32 = arith.constant 0 : i32
    %c0_i32_0 = arith.constant 0 : i32
    return %2, %c0_i32 : i32, i32
  }
  func.func @transform_2(%arg0: i32, %arg1: i32) -> (i32, i32) {
    %c0_i32 = arith.constant 0 : i32
    %c0_i32_0 = arith.constant 0 : i32
    return %arg0, %c0_i32 : i32, i32
  }
}

</mosaic_0001>

<llo_original>
// kernel: tpu_custom_call.1
$region0: #{tpu_custom_call.1}
  #allocation0 [shape = 'u32[]', space=smem, size = 0x4, offset = 0x4, fixed_abs, tag = 'smem constant byte address 0x4 - core index']
  #allocation1 [shape = 'u32[144,128]{1,0:T(1,128)}', space=vmem, size = 0x12000, scoped, tag = 'internal scratch']
  %s0 = inlined_call_operand.vmem [shape: f32[200,128], index: 0, kind: input, shape index: {}]
  %s1 = inlined_call_operand.vmem [shape: s32[200,1], index: 1, kind: input, shape index: {}]
  %s2 = inlined_call_operand.hbm [shape: f32[16,128], index: 2, kind: output, shape index: {}]
  %s3 = sld [smem:[#allocation0]]
  $region45: #{tpu_custom_call.1} parent=0
    _
  %s5 = ssub.s32 1, %s3
  %s6 = scalar_select 0, %s5, %s3
  $region1: #{tpu_custom_call.1} parent=0
    #allocation2 [shape = 'u8[8192]{0}', space=vmem, size = 0x2000, scoped, tag = 'output window, operand 0']
    #allocation3 [shape = 's32[2]{0}', space=sflag, size = 0x8, scoped, tag = 'scoped memory for tpu_custom_call.1']
    %7 = vsyncpa [#allocation3], 0
    %s8 = scalar_lea.sflag [#allocation3], 1
    %9 = vsyncpa %s8, 0
    loop: start=0, step=1, limit=10
    $region2: #{tpu_custom_call.1} parent=1 // loop_pre_header
      _
    $region3: #{tpu_custom_call.1} parent=1 // loop_header
      %s11 = sphi 0, %s15
      %p12 = scmp.ge.s32.totalorder %s11, 10
      %s18 = sphi 0, %s30
      %s19 = sphi 0, %s26
      %s20 = sphi 0, %s18
      %s21 = sphi 0, %s19
      %s22 = sphi 0, %s20
      %s23 = sphi 0, %s21
      %s41 = sphi 0, %s43
      %s44 = sphi 0, %s41
      %s45 = sphi 0, %s44
      %s61 = sphi 0, %s45
      %s75 = sphi 0, %s77
      %s78 = sphi 0, %s75
      %s79 = sphi 0, %s78
      %s95 = sphi 0, %s79
      %s101 = sphi 0, %s103
      %s104 = sphi 0, %s101
      %s105 = sphi 0, %s104
      %s121 = sphi 0, %s105
    $region4: #{tpu_custom_call.1} parent=1 // loop_header_branch
      %14 = sbr.rel (%p12) target = $region8
    $region5: #{tpu_custom_call.1} parent=1 // loop_body
      %s16 = ssub.s32 %s11, 1
      %s17 = ssub.s32 %s11, 2
      %s24 = sadd.s32 1, %s19
      %p25 = scmp.ge.s32.totalorder %s24, 4
      %s26 = scalar_select %p25, 0, %s24
      %s27 = sadd.s32 1, %s18
      %s28 = scalar_select %p25, %s27, %s18
      %p29 = scmp.ge.s32.totalorder %s28, 2
      %s30 = scalar_select %p29, 0, %s28
      %s31 = smul.u32 %s18, 4
      %s32 = sadd.s32 %s31, %s19
      %p33 = scmp.lt.s32.totalorder %s32, 6
      %s34 = scalar_select %p33, %s32, 6
      %s35 = smul.u32 %s30, 4
      %s36 = sadd.s32 %s35, %s26
      %p37 = scmp.lt.s32.totalorder %s36, 6
      %s38 = scalar_select %p37, %s36, 6
      %s39 = ssub.s32 %s34, %s38
      %p40 = scmp.eq.s32.totalorder %s39, 0
      %s42 = sadd.s32 %s41, 1
      %s43 = scalar_select %p40, %s41, %s42
      %p46 = pneg %p40
      %p47 = scmp.eq.s32.totalorder %s11, 7
      %p48 = por %p46, %p47
      %p49 = scmp.ne.s32.totalorder %s41, %s44
      %p50 = scmp.eq.s32.totalorder %s11, 0
      %p51 = por %p49, %p50
      %p52 = scmp.ne.s32.totalorder %s41, %s44
      %p53 = scmp.eq.s32.totalorder %s16, 7
      %p54 = por %p52, %p53
      %p55 = scmp.ne.s32.totalorder %s44, %s45
      %p56 = scmp.eq.s32.totalorder %s16, 0
      %p57 = por %p55, %p56
      %p58 = scmp.ne.s32.totalorder %s44, %s45
      %p59 = scmp.eq.s32.totalorder %s17, 7
      %p60 = por %p58, %p59
      %p62 = scmp.ne.s32.totalorder %s45, %s61
      %p63 = scmp.eq.s32.totalorder %s17, 0
      %p64 = por %p62, %p63
      %s65 = smul.u32 %s18, 4
      %s66 = sadd.s32 %s65, %s19
      %p67 = scmp.lt.s32.totalorder %s66, 6
      %s68 = scalar_select %p67, %s66, 6
      %s69 = smul.u32 %s30, 4
      %s70 = sadd.s32 %s69, %s26
      %p71 = scmp.lt.s32.totalorder %s70, 6
      %s72 = scalar_select %p71, %s70, 6
      %s73 = ssub.s32 %s68, %s72
      %p74 = scmp.eq.s32.totalorder %s73, 0
      %s76 = sadd.s32 %s75, 1
      %s77 = scalar_select %p74, %s75, %s76
      %p80 = pneg %p74
      %p81 = scmp.eq.s32.totalorder %s11, 7
      %p82 = por %p80, %p81
      %p83 = scmp.ne.s32.totalorder %s75, %s78
      %p84 = scmp.eq.s32.totalorder %s11, 0
      %p85 = por %p83, %p84
      %p86 = scmp.ne.s32.totalorder %s75, %s78
      %p87 = scmp.eq.s32.totalorder %s16, 7
      %p88 = por %p86, %p87
      %p89 = scmp.ne.s32.totalorder %s78, %s79
      %p90 = scmp.eq.s32.totalorder %s16, 0
      %p91 = por %p89, %p90
      %p92 = scmp.ne.s32.totalorder %s78, %s79
      %p93 = scmp.eq.s32.totalorder %s17, 7
      %p94 = por %p92, %p93
      %p96 = scmp.ne.s32.totalorder %s79, %s95
      %p97 = scmp.eq.s32.totalorder %s17, 0
      %p98 = por %p96, %p97
      %s99 = ssub.s32 %s18, %s30
      %p100 = scmp.eq.s32.totalorder %s99, 0
      %s102 = sadd.s32 %s101, 1
      %s103 = scalar_select %p100, %s101, %s102
      %p106 = pneg %p100
      %p107 = scmp.eq.s32.totalorder %s11, 7
      %p108 = por %p106, %p107
      %p109 = scmp.ne.s32.totalorder %s101, %s104
      %p110 = scmp.eq.s32.totalorder %s11, 0
      %p111 = por %p109, %p110
      %p112 = scmp.ne.s32.totalorder %s101, %s104
      %p113 = scmp.eq.s32.totalorder %s16, 7
      %p114 = por %p112, %p113
      %p115 = scmp.ne.s32.totalorder %s104, %s105
      %p116 = scmp.eq.s32.totalorder %s16, 0
      %p117 = por %p115, %p116
      %p118 = scmp.ne.s32.totalorder %s104, %s105
      %p119 = scmp.eq.s32.totalorder %s17, 7
      %p120 = por %p118, %p119
      %p122 = scmp.ne.s32.totalorder %s105, %s121
      %p123 = scmp.eq.s32.totalorder %s17, 0
      %p124 = por %p122, %p123
      %p125 = scmp.le.s32.totalorder 1, %s11
      %p126 = scmp.lt.s32.totalorder %s11, 9
      %p127 = pnand %p125, %p126
      %p128 = pneg %p127
      // Predicated region
      $region9: #{tpu_custom_call.1} parent=5 // pred_check
        _
      $region10: #{tpu_custom_call.1} parent=5 // pred_check_branch
        %130 = sbr.rel (%p127) target = $region12
      $region11: #{tpu_custom_call.1} parent=5 // pred_region
        %s131 = ssub.s32 %s11, 1
      $region12: #{tpu_custom_call.1} parent=5 // pred_fallthru
        _
      %p132 = scmp.lt.s32.totalorder %s11, 8
      // Predicated region
      $region13: #{tpu_custom_call.1} parent=5 // pred_check
        %p133 = pneg %p132
      $region14: #{tpu_custom_call.1} parent=5 // pred_check_branch
        %135 = sbr.rel (%p133) target = $region16
      $region15: #{tpu_custom_call.1} parent=5 // pred_region
        // Predicated region
        $region17: #{tpu_custom_call.1} parent=15 // pred_check
          %p136 = pneg %p51
        $region18: #{tpu_custom_call.1} parent=15 // pred_check_branch
          %138 = sbr.rel (%p136) target = $region20
        $region19: #{tpu_custom_call.1} parent=15 // pred_region
          %s139 = smul.u32 %s18, 4
          %s140 = sadd.s32 %s139, %s19
          %p141 = scmp.lt.s32.totalorder %s140, 6
          %s142 = scalar_select %p141, %s140, 6
          %s143 = smul.u32 4, %s142
          %s144 = ssub.s32 25, %s143
          %p145 = scmp.lt.s32.totalorder %s144, 4
          %s146 = scalar_select %p145, %s144, 4
          %s147 = smul.u32 128, %s146
          %p148 = scmp.lt.s32.totalorder %s143, 24
          %s149 = scalar_select %p148, %s143, 24
          %s150 = smul.addr %s149, 8
          %s151 = scalar_lea.vmem %s0, %s150
          %s152 = smul.u32 %s18, 4
          %s153 = sadd.s32 %s152, %s19
          %p154 = scmp.lt.s32.totalorder %s153, 6
          %s155 = scalar_select %p154, %s153, 6
          %s156 = smul.u32 4, %s155
          %s157 = ssub.s32 25, %s156
          %p158 = scmp.lt.s32.totalorder %s157, 4
          %s159 = scalar_select %p158, %s157, 4
          %s160 = smul.u32 128, %s159
        $region20: #{tpu_custom_call.1} parent=15 // pred_fallthru
          _
        // Predicated region
        $region21: #{tpu_custom_call.1} parent=15 // pred_check
          %p161 = pneg %p85
        $region22: #{tpu_custom_call.1} parent=15 // pred_check_branch
          %163 = sbr.rel (%p161) target = $region24
        $region23: #{tpu_custom_call.1} parent=15 // pred_region
          %s164 = smul.u32 %s18, 4
          %s165 = sadd.s32 %s164, %s19
          %p166 = scmp.lt.s32.totalorder %s165, 6
          %s167 = scalar_select %p166, %s165, 6
          %s168 = smul.u32 4, %s167
          %s169 = ssub.s32 25, %s168
          %p170 = scmp.lt.s32.totalorder %s169, 4
          %s171 = scalar_select %p170, %s169, 4
          %s172 = smul.u32 128, %s171
          %p173 = scmp.lt.s32.totalorder %s168, 24
          %s174 = scalar_select %p173, %s168, 24
          %s175 = smul.addr %s174, 8
          %s176 = scalar_lea.vmem %s1, %s175
          %s177 = smul.u32 %s18, 4
          %s178 = sadd.s32 %s177, %s19
          %p179 = scmp.lt.s32.totalorder %s178, 6
          %s180 = scalar_select %p179, %s178, 6
          %s181 = smul.u32 4, %s180
          %s182 = ssub.s32 25, %s181
          %p183 = scmp.lt.s32.totalorder %s182, 4
          %s184 = scalar_select %p183, %s182, 4
          %s185 = smul.u32 128, %s184
        $region24: #{tpu_custom_call.1} parent=15 // pred_fallthru
          _
      $region16: #{tpu_custom_call.1} parent=5 // pred_fallthru
        _
      %p186 = scmp.le.s32.totalorder 1, %s11
      %p187 = scmp.lt.s32.totalorder %s11, 9
      %p188 = pnand %p186, %p187
      %p189 = pneg %p188
      // Predicated region
      $region25: #{tpu_custom_call.1} parent=5 // pred_check
        _
      $region26: #{tpu_custom_call.1} parent=5 // pred_check_branch
        %191 = sbr.rel (%p188) target = $region28
      $region27: #{tpu_custom_call.1} parent=5 // pred_region
        %s192 = ssub.s32 %s11, 1
        %s193 = smul.u32 %s20, 4
        %s194 = sadd.s32 %s193, %s21
        %p195 = scmp.lt.s32.totalorder %s194, 6
        %s196 = scalar_select %p195, %s194, 6
        %s197 = smul.u32 4, %s196
        %s198 = ssub.s32 25, %s197
        %p199 = scmp.lt.s32.totalorder %s198, 4
        %s200 = scalar_select %p199, %s198, 4
        %s201 = smul.u32 128, %s200
        %p202 = scmp.lt.s32.totalorder %s197, 24
        %s203 = scalar_select %p202, %s197, 24
        %s204 = smul.addr %s203, 8
        %s205 = scalar_lea.vmem %s0, %s204
        %p206 = pneg %p57
        %p207 = pneg %p54
        %s208 = smul.u32 %s20, 4
        %s209 = sadd.s32 %s208, %s21
        %p210 = scmp.lt.s32.totalorder %s209, 6
        %s211 = scalar_select %p210, %s209, 6
        %s212 = smul.u32 4, %s211
        %s213 = ssub.s32 25, %s212
        %p214 = scmp.lt.s32.totalorder %s213, 4
        %s215 = scalar_select %p214, %s213, 4
        %s216 = smul.u32 128, %s215
        %p217 = scmp.lt.s32.totalorder %s212, 24
        %s218 = scalar_select %p217, %s212, 24
        %s219 = smul.addr %s218, 8
        %s220 = scalar_lea.vmem %s1, %s219
        %p221 = pneg %p91
        %p222 = pneg %p88
        %p223 = pneg %p117
        %p224 = pneg %p114
        %s225 = sand.u32 %s104, 1
        %s226 = scalar_lea.sflag [#allocation3], %s225
        %s227 = sand.u32 %s104, 1
        %s228 = smul.addr %s227, 8
        %s229 = scalar_lea.vmem [#allocation2], %s228
        %s230 = smul.u32 %s20, 4
        %s231 = sadd.s32 %s230, %s21
        %p232 = scmp.lt.s32.totalorder %s231, 6
        %s233 = scalar_select %p232, %s231, 6
        %s234 = smul.u32 4, %s233
        %s235 = ssub.s32 25, %s234
        %p236 = scmp.lt.s32.totalorder %s235, 4
        %s237 = scalar_select %p236, %s235, 4
        %s238 = smul.u32 128, %s237
        %p239 = scmp.lt.s32.totalorder %s234, 24
        %s240 = scalar_select %p239, %s234, 24
        %s241 = smul.addr %s240, 8
        %s242 = scalar_lea.vmem %s0, %s241
        %s243 = smul.u32 %s20, 4
        %s244 = sadd.s32 %s243, %s21
        %p245 = scmp.lt.s32.totalorder %s244, 6
        %s246 = scalar_select %p245, %s244, 6
        %s247 = smul.u32 4, %s246
        %s248 = ssub.s32 25, %s247
        %p249 = scmp.lt.s32.totalorder %s248, 4
        %s250 = scalar_select %p249, %s248, 4
        %s251 = smul.u32 128, %s250
        %s252 = smul.u32 %s20, 4
        %s253 = sadd.s32 %s252, %s21
        %p254 = scmp.lt.s32.totalorder %s253, 6
        %s255 = scalar_select %p254, %s253, 6
        %s256 = smul.u32 4, %s255
        %s257 = ssub.s32 25, %s256
        %p258 = scmp.lt.s32.totalorder %s257, 4
        %s259 = scalar_select %p258, %s257, 4
        %s260 = smul.u32 128, %s259
        %p261 = scmp.lt.s32.totalorder %s256, 24
        %s262 = scalar_select %p261, %s256, 24
        %s263 = smul.addr %s262, 8
        %s264 = scalar_lea.vmem %s1, %s263
        %s265 = smul.u32 %s20, 4
        %s266 = sadd.s32 %s265, %s21
        %p267 = scmp.lt.s32.totalorder %s266, 6
        %s268 = scalar_select %p267, %s266, 6
        %s269 = smul.u32 4, %s268
        %s270 = ssub.s32 25, %s269
        %p271 = scmp.lt.s32.totalorder %s270, 4
        %s272 = scalar_select %p271, %s270, 4
        %s273 = smul.u32 128, %s272
        %p274 = scmp.eq.s32.totalorder %s21, 0
        // Predicated region
        $region29: #{tpu_custom_call.1} parent=27 // pred_check
          %p275 = pneg %p274
        $region30: #{tpu_custom_call.1} parent=27 // pred_check_branch
          %277 = sbr.rel (%p275) target = $region32
        $region31: #{tpu_custom_call.1} parent=27 // pred_region
          %278 = vst [vmem:[%s229] sm:$0xff] 0.0
        $region32: #{tpu_custom_call.1} parent=27 // pred_fallthru
          _
        %v279 = vld [vmem:[%s242] sm:$0xff]
        %v280 = vld [vmem:[%s242 + $0x8] sm:$0xff]
        %v281 = vld [vmem:[%s242 + $0x10] sm:$0xff]
        %v282 = vld [vmem:[%s242 + $0x18] sm:$0xff]
        %v283 = vld [vmem:[%s264] sm:$0xff]
        %v284 = vld [vmem:[%s264 + $0x8] sm:$0xff]
        %v285 = vld [vmem:[%s264 + $0x10] sm:$0xff]
        %v286 = vld [vmem:[%s264 + $0x18] sm:$0xff]
        %287 = vmax.xlane.f32.xlu0 %v279
        %v288 = vpop.xlane.xlu0 %287
        %289 = vmax.xlane.f32.xlu0 %v280
        %v290 = vpop.xlane.xlu0 %289
        %291 = vmax.xlane.f32.xlu0 %v281
        %v292 = vpop.xlane.xlu0 %291
        %293 = vmax.xlane.f32.xlu0 %v282
        %v294 = vpop.xlane.xlu0 %293
        %v295 = vsub.f32 %v279, %v288
        %v296 = vsub.f32 %v280, %v290
        %v297 = vsub.f32 %v281, %v292
        %v298 = vsub.f32 %v282, %v294
        %v299 = vmul.f32 %v295, 1.442695
        %v300 = vpow.pop %v299
        %v301 = vmul.f32 %v296, 1.442695
        %v302 = vpow.pop %v301
        %v303 = vmul.f32 %v297, 1.442695
        %v304 = vpow.pop %v303
        %v305 = vmul.f32 %v298, 1.442695
        %v306 = vpow.pop %v305
        %307 = vadd.xlane.f32.xlu0 %v300
        %v308 = vpop.xlane.xlu0 %307
        %309 = vadd.xlane.f32.xlu0 %v302
        %v310 = vpop.xlane.xlu0 %309
        %311 = vadd.xlane.f32.xlu0 %v304
        %v312 = vpop.xlane.xlu0 %311
        %313 = vadd.xlane.f32.xlu0 %v306
        %v314 = vpop.xlane.xlu0 %313
        %v315 = vlog2.pop %v308
        %v316 = vmul.f32 %v315, 0.6931472
        %v317 = vlog2.pop %v310
        %v318 = vmul.f32 %v317, 0.6931472
        %v319 = vlog2.pop %v312
        %v320 = vmul.f32 %v319, 0.6931472
        %v321 = vlog2.pop %v314
        %v322 = vmul.f32 %v321, 0.6931472
        %v323 = vlaneseq
        %v324 = vand.u32 %v323, 127
        %325 = vset.pattern.permute.xlu0 0
        %326 = vperm.xlu0 %325, %v283
        %v327 = vpop.permute.xlu0 %326
        %328 = vset.pattern.permute.xlu0 0
        %329 = vperm.xlu0 %328, %v284
        %v330 = vpop.permute.xlu0 %329
        %331 = vset.pattern.permute.xlu0 0
        %332 = vperm.xlu0 %331, %v285
        %v333 = vpop.permute.xlu0 %332
        %334 = vset.pattern.permute.xlu0 0
        %335 = vperm.xlu0 %334, %v286
        %v336 = vpop.permute.xlu0 %335
        %vm337 = vcmp.eq.s32.totalorder %v324, %v327
        %vm338 = vcmp.eq.s32.totalorder %v324, %v330
        %vm339 = vcmp.eq.s32.totalorder %v324, %v333
        %vm340 = vcmp.eq.s32.totalorder %v324, %v336
        %v341 = vsel %vm337, %v295, 0.0
        %v342 = vsel %vm338, %v296, 0.0
        %v343 = vsel %vm339, %v297, 0.0
        %v344 = vsel %vm340, %v298, 0.0
        %345 = vadd.xlane.f32.xlu0 %v341
        %v346 = vpop.xlane.xlu0 %345
        %347 = vadd.xlane.f32.xlu0 %v342
        %v348 = vpop.xlane.xlu0 %347
        %349 = vadd.xlane.f32.xlu0 %v343
        %v350 = vpop.xlane.xlu0 %349
        %351 = vadd.xlane.f32.xlu0 %v344
        %v352 = vpop.xlane.xlu0 %351
        %s353 = smul.u32 %s20, 4
        %s354 = sadd.s32 %s353, %s21
        %v355 = vlaneseq
        %v356 = vshrl.u32 %v355, 7
        %v357 = vadd.s32 %v356, 8
        %v358 = vadd.s32 %v356, 16
        %v359 = vadd.s32 %v356, 24
        %s360 = smul.u32 %s354, 32
        %v361 = vstv %s360
        %v362 = vadd.s32 %v356, %v361
        %v363 = vadd.s32 %v357, %v361
        %v364 = vadd.s32 %v358, %v361
        %v365 = vadd.s32 %v359, %v361
        %vm366 = vcmp.lt.s32.totalorder %v362, 200
        %vm367 = vcmp.lt.s32.totalorder %v363, 200
        %vm368 = vcmp.lt.s32.totalorder %v364, 200
        %vm369 = vcmp.lt.s32.totalorder %v365, 200
        %v370 = vsub.f32 %v316, %v346
        %v371 = vsub.f32 %v318, %v348
        %v372 = vsub.f32 %v320, %v350
        %v373 = vsub.f32 %v322, %v352
        %v374 = vsel %vm366, %v370, 0.0
        %v375 = vsel %vm367, %v371, 0.0
        %v376 = vsel %vm368, %v372, 0.0
        %v377 = vsel %vm369, %v373, 0.0
        %v378 = vld [vmem:[%s229] sm:$0xff]
        %vm379 = vcmask 7168
        %v380 = vsel %vm379, %v374, 0.0
        %v381 = vsel %vm379, %v375, 0.0
        %v382 = vadd.f32 %v380, %v381
        %v383 = vsel %vm379, %v376, 0.0
        %v384 = vadd.f32 %v382, %v383
        %v385 = vsel %vm379, %v377, 0.0
        %v386 = vadd.f32 %v384, %v385
        %387 = vadd.xlane.f32.xlu0 %v386
        %v388 = vpop.xlane.xlu0 %387
        %v389 = vrot.slane %v388, 4
        %v390 = vadd.f32 %v388, %v389
        %v391 = vrot.slane %v390, 2
        %v392 = vadd.f32 %v390, %v391
        %v393 = vrot.slane %v392, 1
        %v394 = vadd.f32 %v392, %v393
        %s395 = vtos %v394
        %v396 = vstv %s395
        %v397 = vadd.f32 %v378, %v396
        %398 = vst [vmem:[%s229] sm:$0xff] %v397
        %s399 = sand.u32 %s104, 1
        %s400 = scalar_lea.sflag [#allocation3], %s399
        %s401 = sand.u32 %s104, 1
        %s402 = smul.addr %s401, 8
        %s403 = scalar_lea.vmem [#allocation2], %s402
        // Predicated region
        $region33: #{tpu_custom_call.1} parent=27 // pred_check
          %p404 = pneg %p114
        $region34: #{tpu_custom_call.1} parent=27 // pred_check_branch
          %406 = sbr.rel (%p404) target = $region36
        $region35: #{tpu_custom_call.1} parent=27 // pred_region
          %s408 = ssub.s32 128, 128
          %409 = vsyncadd %s400, %s408
          %s410 = smul.addr %s20, 128
          %s411 = scalar_lea.hbm %s2, %s410
          %s413 = sshll.u32 %s403, 4
          %s414 = int_to_ptr.vmem [resolvable:$true] %s413
          %416 = dma.vmem_to_hbm [thread:$0]  %s414, 128, %s411, %s400
        $region36: #{tpu_custom_call.1} parent=27 // pred_fallthru
          _
      $region28: #{tpu_custom_call.1} parent=5 // pred_fallthru
        _
      %p417 = scmp.le.s32.totalorder 2, %s11
      // Predicated region
      $region37: #{tpu_custom_call.1} parent=5 // pred_check
        %p418 = pneg %p417
      $region38: #{tpu_custom_call.1} parent=5 // pred_check_branch
        %420 = sbr.rel (%p418) target = $region40
      $region39: #{tpu_custom_call.1} parent=5 // pred_region
        %s421 = ssub.s32 %s11, 2
        // Predicated region
        $region41: #{tpu_custom_call.1} parent=39 // pred_check
          %p422 = pneg %p120
        $region42: #{tpu_custom_call.1} parent=39 // pred_check_branch
          %424 = sbr.rel (%p422) target = $region44
        $region43: #{tpu_custom_call.1} parent=39 // pred_region
          %s425 = sand.u32 %s105, 1
          %s426 = scalar_lea.sflag [#allocation3], %s425
          %s427 = sand.u32 %s105, 1
          %s428 = smul.addr %s427, 8
          %s429 = scalar_lea.vmem [#allocation2], %s428
          %430 = dma.done %s426, 128
        $region44: #{tpu_custom_call.1} parent=39 // pred_fallthru
          _
      $region40: #{tpu_custom_call.1} parent=5 // pred_fallthru
        _
    $region6: #{tpu_custom_call.1} parent=1 // loop_footer
      %s15 = sadd.s32 1, %s11
    $region7: #{tpu_custom_call.1} parent=1 // loop_footer_branch
      %10 = sbr.rel target = $region3
    $region8: #{tpu_custom_call.1} parent=1 // loop_exit
      _
    %431 = vsyncpa [#allocation3], 1
    %s432 = scalar_lea.sflag [#allocation3], 1
    %433 = vsyncpa %s432, 1

</llo_original>
